<compile_context>
chip_gen: v6e
topology: v6e:2x2x1
jax: 0.10.0
libtpu: 0.0.40
codegen_flags: <defaults>
</compile_context>

<pallas_src>
import functools

import numpy as np
import jax
import jax.numpy as jnp
from jax.experimental import pallas as pl
from jax.experimental.pallas import tpu as pltpu


def _round_up(x, m):
    return ((x + m - 1) // m) * m


# ----------------------------- Pallas kernel ------------------------------ #
def _embed_kernel(patches_ref, w_ref, pos_ref, out_ref):
    # patches_ref: (1, TN, Kp) bf16   w_ref: (Kp, Dp) bf16 (resident)
    # pos_ref:     (1, TN, Dp) bf16   out_ref: (1, TN, Dp) bf16
    proj = jnp.dot(patches_ref[0], w_ref[...],
                   preferred_element_type=jnp.float32)        # (TN, Dp) f32
    out_ref[0] = (proj + pos_ref[0].astype(jnp.float32)).astype(out_ref.dtype)


# --------------------------- host-side position ids ------------------------ #
# TODO(synk): torch.bucketize(right=True) + boolean-mask scatter over variable
# per-image patch counts is data-dependent integer bookkeeping with no clean
# Pallas equivalent; it is computed on the host with numpy.
def _compute_position_ids(patch_attention_mask, num_patches_per_side,
                          tgt_sizes=None):
    B, Hp, Wp = patch_attention_mask.shape
    nps = num_patches_per_side
    boundaries = np.arange(1.0 / nps, 1.0, 1.0 / nps)
    position_ids = np.zeros((B, Hp * Wp), dtype=np.int32)
    for b in range(B):
        m = patch_attention_mask[b]
        if tgt_sizes is not None:
            nb_h = int(tgt_sizes[b][0])
            nb_w = int(tgt_sizes[b][1])
        else:
            nb_h = int(m[:, 0].sum())
            nb_w = int(m[0].sum())
        if nb_h == 0 or nb_w == 0:
            continue  # fully-masked image: ids stay 0 (matches torch init)
        fch = np.arange(0.0, 1.0 - 1e-6, 1.0 / nb_h)
        fcw = np.arange(0.0, 1.0 - 1e-6, 1.0 / nb_w)
        bch = np.searchsorted(boundaries, fch, side="right")
        bcw = np.searchsorted(boundaries, fcw, side="right")
        pos = (bch[:, None] * nps + bcw).reshape(-1).astype(np.int32)
        position_ids[b][m.reshape(-1)] = pos
    return position_ids


# --------------------------- jitted device path ----------------------------- #
@functools.partial(jax.jit, static_argnames=("patch_size", "tile_n"))
def _device_forward(pixel_values, ids, w, bias, pos_emb, patch_size, tile_n):
    B, C, H, W = pixel_values.shape
    P = patch_size
    Hp, Wp = H // P, W // P
    N = Hp * Wp
    K = C * P * P
    D = w.shape[0]
    K_pad = _round_up(K, 128)
    D_pad = _round_up(D, 128)

    # patchify NCHW -> (B, N, K); bf16 immediately, single zero-pad on K only
    patches = pixel_values.reshape(B, C, Hp, P, Wp, P)
    patches = jnp.transpose(patches, (0, 2, 4, 1, 3, 5)).reshape(B, N, K)
    patches = patches.astype(jnp.bfloat16)
    if K_pad != K:
        patches = jnp.pad(patches, ((0, 0), (0, 0), (0, K_pad - K)))

    # conv weight [D, C, P, P] -> (K, D) bf16, single pad
    w_flat = jnp.transpose(w.reshape(D, K), (1, 0)).astype(jnp.bfloat16)
    if (K_pad, D_pad) != (K, D):
        w_flat = jnp.pad(w_flat, ((0, K_pad - K), (0, D_pad - D)))

    # pre-gathered (pos_emb + conv bias) stream, bf16
    pos_plus_bias = (pos_emb[ids] + bias[None, None, :]).astype(jnp.bfloat16)
    if D_pad != D:
        pos_plus_bias = jnp.pad(pos_plus_bias,
                                ((0, 0), (0, 0), (0, D_pad - D)))

    # tile the patch dim; ragged last tile is masked by Pallas (no N padding)
    if N <= tile_n:
        TN = N                       # full extent -> always a valid block dim
    else:
        TN = _round_up(tile_n, 128)  # MXU/sublane friendly tile
    n_tiles = pl.cdiv(N, TN)
    grid = (B, n_tiles)

    # VMEM: double-buffered patch/pos/out tiles + resident weight (counted x1)
    vmem_need = (2 * TN * K_pad * 2          # patches tile, bf16, 2 bufs
                 + K_pad * D_pad * 2         # weight, bf16, resident
                 + 2 * TN * D_pad * 2        # pos tile, bf16, 2 bufs
                 + 2 * TN * D_pad * 2)       # out tile, bf16, 2 bufs
    vmem_limit = int(min(max(2 * vmem_need + (4 << 20), 16 << 20), 40 << 20))

    cost = pl.CostEstimate(
        flops=2 * B * N * K_pad * D_pad,
        transcendentals=0,
        bytes_accessed=(B * N * K_pad * 2 + K_pad * D_pad * 2
                        + B * N * D_pad * 2      # pos stream (bf16)
                        + B * N * D_pad * 2))    # output (bf16)

    out = pl.pallas_call(
        _embed_kernel,
        out_shape=jax.ShapeDtypeStruct((B, N, D_pad), jnp.bfloat16),
        grid_spec=pltpu.PrefetchScalarGridSpec(
            num_scalar_prefetch=0,
            grid=grid,
            in_specs=[
                pl.BlockSpec((1, TN, K_pad), lambda bi, ni: (bi, ni, 0)),
                pl.BlockSpec((K_pad, D_pad), lambda bi, ni: (0, 0)),
                pl.BlockSpec((1, TN, D_pad), lambda bi, ni: (bi, ni, 0)),
            ],
            out_specs=pl.BlockSpec((1, TN, D_pad), lambda bi, ni: (bi, ni, 0)),
        ),
        compiler_params=pltpu.CompilerParams(
            dimension_semantics=("parallel", "parallel"),
            vmem_limit_bytes=vmem_limit),
        cost_estimate=cost,
    )(patches, w_flat, pos_plus_bias)

    # only the toy config (D not a multiple of 128) needs a D slice;
    # real Idefics2 (D=1152) returns the kernel output directly.
    if D_pad != D:
        out = out[:, :, :D]
    return out


# ------------------------------- wrapper ----------------------------------- #
def idefics2_vision_embeddings(pixel_values, patch_attention_mask, params,
                               patch_size, num_patches_per_side,
                               tgt_sizes=None, tile_n=1024):
    position_ids = _compute_position_ids(
        np.asarray(patch_attention_mask), num_patches_per_side, tgt_sizes)
    ids = jnp.asarray(position_ids, dtype=jnp.int32)           # (B, N)
    return _device_forward(pixel_values, ids, params["w"], params["b"],
                           params["pos_emb"], patch_size=patch_size,
                           tile_n=tile_n)


# ------------------------------ reference ---------------------------------- #
def _reference(pixel_values, patch_attention_mask, params, patch_size,
               num_patches_per_side, tgt_sizes=None):
    B, C, H, W = pixel_values.shape
    D = params["w"].shape[0]
    conv = jax.lax.conv_general_dilated(
        pixel_values, params["w"],
        window_strides=(patch_size, patch_size), padding="VALID",
        dimension_numbers=("NCHW", "OIHW", "NCHW"))
    conv = conv + params["b"].reshape(1, D, 1, 1)
    emb = conv.reshape(B, D, -1).transpose(0, 2, 1)          # [B, N, D]
    pos_ids = _compute_position_ids(
        np.asarray(patch_attention_mask), num_patches_per_side, tgt_sizes)
    emb = emb + params["pos_emb"][jnp.asarray(pos_ids)]
    return emb


# --------------------------------- main ------------------------------------ #
if __name__ == "__main__":
    B, C = 2, 4
    image_size, patch_size = 32, 8
    D = 32
    nps = image_size // patch_size                  # num_patches_per_side = 4
    num_positions = nps * nps                       # 16

    key = jax.random.PRNGKey(0)
    k1, k2, k3, k4 = jax.random.split(key, 4)
    params = {
        "w": 0.02 * jax.random.normal(k1, (D, C, patch_size, patch_size),
                                      jnp.float32),
        "b": 0.02 * jax.random.normal(k2, (D,), jnp.float32),
        "pos_emb": 0.02 * jax.random.normal(k3, (num_positions, D),
                                            jnp.float32),
    }
    pixel_values = jax.random.normal(k4, (B, C, image_size, image_size),
                                     jnp.float32)

    # variable-resolution patch attention masks (batch 0 full, batch 1 is 3x2)
    patch_attention_mask = np.zeros((B, nps, nps), dtype=bool)
    patch_attention_mask[0, :, :] = True
    patch_attention_mask[1, :3, :2] = True

    out = idefics2_vision_embeddings(pixel_values, patch_attention_mask,
                                     params, patch_size, nps)
    out = jax.block_until_ready(out)

    ref = _reference(pixel_values, patch_attention_mask, params, patch_size,
                     nps)
    # bf16 matmul operands / bf16 pos + output streams (f32 accumulation) vs
    # the f32 conv reference: compare with a bf16-appropriate tolerance.
    np.testing.assert_allclose(np.asarray(out).astype(np.float32),
                               np.asarray(ref), rtol=2e-2, atol=2e-2)
    print("KERNEL_OK")
</pallas_src>

<mosaic_0001>
module attributes {stable_mosaic.version = 11 : i64} {
  func.func @_embed_kernel(%arg0: i32, %arg1: i32, %arg2: memref<1x16x256xbf16, #tpu.memory_space<vmem>>, %arg3: memref<256x128xbf16, #tpu.memory_space<vmem>>, %arg4: memref<1x16x128xbf16, #tpu.memory_space<vmem>>, %arg5: memref<1x16x128xbf16, #tpu.memory_space<vmem>>) attributes {dimension_semantics = [#tpu.dimension_semantics<parallel>, #tpu.dimension_semantics<parallel>], iteration_bounds = array<i64: 2, 1>, scalar_prefetch = 0 : i64, scratch_operands = 0 : i64, tpu.core_type = #tpu.core_type<tc>, window_params = [{transform_indices = @transform_0, window_bounds = array<i64: 1, 16, 256>}, {pipeline_mode = #tpu.pipeline_mode<synchronous>, transform_indices = @transform_1, window_bounds = array<i64: 256, 128>}, {transform_indices = @transform_2, window_bounds = array<i64: 1, 16, 128>}, {transform_indices = @transform_3, window_bounds = array<i64: 1, 16, 128>}]} {
    %c0 = arith.constant 0 : index
    %c0_0 = arith.constant 0 : index
    %c0_1 = arith.constant 0 : index
    %0 = vector.load %arg2[%c0, %c0_0, %c0_1] : memref<1x16x256xbf16, #tpu.memory_space<vmem>>, vector<1x16x256xbf16>
    %1 = vector.shape_cast %0 : vector<1x16x256xbf16> to vector<16x256xbf16>
    %c0_2 = arith.constant 0 : index
    %c0_3 = arith.constant 0 : index
    %2 = vector.load %arg3[%c0_2, %c0_3] : memref<256x128xbf16, #tpu.memory_space<vmem>>, vector<256x128xbf16>
    %cst = arith.constant dense<0.000000e+00> : vector<16x128xf32>
    %3 = tpu.matmul %1, %2, %cst {dimension_numbers = #tpu.dot_dimension_numbers<[1], [0], [0], [1], [0, 0, 1, 1], [], []>} : vector<16x256xbf16>, vector<256x128xbf16>, vector<16x128xf32> -> vector<16x128xf32>
    %c0_4 = arith.constant 0 : index
    %c0_5 = arith.constant 0 : index
    %c0_6 = arith.constant 0 : index
    %4 = vector.load %arg4[%c0_4, %c0_5, %c0_6] : memref<1x16x128xbf16, #tpu.memory_space<vmem>>, vector<1x16x128xbf16>
    %5 = vector.shape_cast %4 : vector<1x16x128xbf16> to vector<16x128xbf16>
    %6 = arith.extf %5 : vector<16x128xbf16> to vector<16x128xf32>
    %7 = arith.addf %3, %6 : vector<16x128xf32>
    %8 = arith.truncf %7 : vector<16x128xf32> to vector<16x128xbf16>
    %c0_7 = arith.constant 0 : index
    %c0_8 = arith.constant 0 : index
    %c0_9 = arith.constant 0 : index
    %9 = vector.load %arg5[%c0_7, %c0_8, %c0_9] : memref<1x16x128xbf16, #tpu.memory_space<vmem>>, vector<1x16x128xbf16>
    %10 = vector.shape_cast %9 : vector<1x16x128xbf16> to vector<16x128xbf16>
    %11 = vector.shape_cast %8 : vector<16x128xbf16> to vector<1x16x128xbf16>
    tpu.vector_store %arg5[%c0_7, %c0_8, %c0_9], %11 {strides = array<i32>} : memref<1x16x128xbf16, #tpu.memory_space<vmem>>, vector<1x16x128xbf16>,
    return
  }
  func.func @transform_0(%arg0: i32, %arg1: i32) -> (i32, i32, i32) {
    %c0_i32 = arith.constant 0 : i32
    %c0_i32_0 = arith.constant 0 : i32
    return %arg0, %arg1, %c0_i32 : i32, i32, i32
  }
  func.func @transform_1(%arg0: i32, %arg1: i32) -> (i32, i32) {
    %c0_i32 = arith.constant 0 : i32
    %c0_i32_0 = arith.constant 0 : i32
    %c0_i32_1 = arith.constant 0 : i32
    return %c0_i32, %c0_i32_0 : i32, i32
  }
  func.func @transform_2(%arg0: i32, %arg1: i32) -> (i32, i32, i32) {
    %c0_i32 = arith.constant 0 : i32
    %c0_i32_0 = arith.constant 0 : i32
    return %arg0, %arg1, %c0_i32 : i32, i32, i32
  }
  func.func @transform_3(%arg0: i32, %arg1: i32) -> (i32, i32, i32) {
    %c0_i32 = arith.constant 0 : i32
    %c0_i32_0 = arith.constant 0 : i32
    return %arg0, %arg1, %c0_i32 : i32, i32, i32
  }
}

</mosaic_0001>

<llo_original>
// kernel: _device_forward.1
$region0: #{_device_forward.1}
  #allocation0 [shape = 'u32[]', space=smem, size = 0x4, offset = 0x4, fixed_abs, tag = 'smem constant byte address 0x4 - core index']
  #allocation1 [shape = 'u32[144,128]{1,0:T(1,128)}', space=vmem, size = 0x12000, scoped, tag = 'internal scratch']
  %s0 = inlined_call_operand.vmem [shape: bf16[2,16,256], index: 0, kind: input, shape index: {}]
  %s1 = inlined_call_operand.vmem [shape: bf16[256,128], index: 1, kind: input, shape index: {}]
  %s2 = inlined_call_operand.vmem [shape: bf16[2,16,128], index: 2, kind: input, shape index: {}]
  %s3 = inlined_call_operand.hbm [shape: bf16[2,16,128], index: 3, kind: output, shape index: {}]
  %s4 = sld [smem:[#allocation0]]
  $region45: #{_device_forward.1} parent=0
    _
  %s6 = ssub.s32 1, %s4
  %s7 = scalar_select 0, %s6, %s4
  $region1: #{_device_forward.1} parent=0
    #allocation2 [shape = 'u8[8192]{0}', space=vmem, size = 0x2000, scoped, tag = 'output window, operand 0']
    #allocation3 [shape = 's32[2]{0}', space=sflag, size = 0x8, scoped, tag = 'scoped memory for _device_forward.1']
    %8 = vsyncpa [#allocation3], 0
    %s9 = scalar_lea.sflag [#allocation3], 1
    %10 = vsyncpa %s9, 0
    loop: start=0, step=1, limit=4
    $region2: #{_device_forward.1} parent=1 // loop_pre_header
      _
    $region3: #{_device_forward.1} parent=1 // loop_header
      %s12 = sphi 0, %s16
      %p13 = scmp.ge.s32.totalorder %s12, 4
      %s19 = sphi 0, %s31
      %s20 = sphi 0, %s27
      %s21 = sphi 0, %s19
      %s22 = sphi 0, %s20
      %s23 = sphi 0, %s21
      %s24 = sphi 0, %s22
      %s36 = sphi 0, %s38
      %s39 = sphi 0, %s36
      %s40 = sphi 0, %s39
      %s56 = sphi 0, %s40
      %s60 = sphi 0, %s60
      %s62 = sphi 0, %s60
      %s63 = sphi 0, %s62
      %s77 = sphi 0, %s63
      %s85 = sphi 0, %s87
      %s88 = sphi 0, %s85
      %s89 = sphi 0, %s88
      %s105 = sphi 0, %s89
      %s113 = sphi 0, %s115
      %s116 = sphi 0, %s113
      %s117 = sphi 0, %s116
      %s133 = sphi 0, %s117
    $region4: #{_device_forward.1} parent=1 // loop_header_branch
      %15 = sbr.rel (%p13) target = $region8
    $region5: #{_device_forward.1} parent=1 // loop_body
      %s17 = ssub.s32 %s12, 1
      %s18 = ssub.s32 %s12, 2
      %s25 = sadd.s32 1, %s20
      %p26 = scmp.ge.s32.totalorder %s25, 1
      %s27 = scalar_select %p26, 0, %s25
      %s28 = sadd.s32 1, %s19
      %s29 = scalar_select %p26, %s28, %s19
      %p30 = scmp.ge.s32.totalorder %s29, 2
      %s31 = scalar_select %p30, 0, %s29
      %s32 = ssub.s32 %s19, %s31
      %s33 = ssub.s32 %s20, %s27
      %s34 = sor.u32 %s32, %s33
      %p35 = scmp.eq.s32.totalorder %s34, 0
      %s37 = sadd.s32 %s36, 1
      %s38 = scalar_select %p35, %s36, %s37
      %p41 = pneg %p35
      %p42 = scmp.eq.s32.totalorder %s12, 1
      %p43 = por %p41, %p42
      %p44 = scmp.ne.s32.totalorder %s36, %s39
      %p45 = scmp.eq.s32.totalorder %s12, 0
      %p46 = por %p44, %p45
      %p47 = scmp.ne.s32.totalorder %s36, %s39
      %p48 = scmp.eq.s32.totalorder %s17, 1
      %p49 = por %p47, %p48
      %p50 = scmp.ne.s32.totalorder %s39, %s40
      %p51 = scmp.eq.s32.totalorder %s17, 0
      %p52 = por %p50, %p51
      %p53 = scmp.ne.s32.totalorder %s39, %s40
      %p54 = scmp.eq.s32.totalorder %s18, 1
      %p55 = por %p53, %p54
      %p57 = scmp.ne.s32.totalorder %s40, %s56
      %p58 = scmp.eq.s32.totalorder %s18, 0
      %p59 = por %p57, %p58
      %s61 = sadd.s32 %s60, 1
      %p64 = scmp.eq.s32.totalorder %s12, 1
      %p65 = scmp.ne.s32.totalorder %s60, %s62
      %p66 = scmp.eq.s32.totalorder %s12, 0
      %p67 = por %p65, %p66
      %p68 = scmp.ne.s32.totalorder %s60, %s62
      %p69 = scmp.eq.s32.totalorder %s17, 1
      %p70 = por %p68, %p69
      %p71 = scmp.ne.s32.totalorder %s62, %s63
      %p72 = scmp.eq.s32.totalorder %s17, 0
      %p73 = por %p71, %p72
      %p74 = scmp.ne.s32.totalorder %s62, %s63
      %p75 = scmp.eq.s32.totalorder %s18, 1
      %p76 = por %p74, %p75
      %p78 = scmp.ne.s32.totalorder %s63, %s77
      %p79 = scmp.eq.s32.totalorder %s18, 0
      %p80 = por %p78, %p79
      %s81 = ssub.s32 %s19, %s31
      %s82 = ssub.s32 %s20, %s27
      %s83 = sor.u32 %s81, %s82
      %p84 = scmp.eq.s32.totalorder %s83, 0
      %s86 = sadd.s32 %s85, 1
      %s87 = scalar_select %p84, %s85, %s86
      %p90 = pneg %p84
      %p91 = scmp.eq.s32.totalorder %s12, 1
      %p92 = por %p90, %p91
      %p93 = scmp.ne.s32.totalorder %s85, %s88
      %p94 = scmp.eq.s32.totalorder %s12, 0
      %p95 = por %p93, %p94
      %p96 = scmp.ne.s32.totalorder %s85, %s88
      %p97 = scmp.eq.s32.totalorder %s17, 1
      %p98 = por %p96, %p97
      %p99 = scmp.ne.s32.totalorder %s88, %s89
      %p100 = scmp.eq.s32.totalorder %s17, 0
      %p101 = por %p99, %p100
      %p102 = scmp.ne.s32.totalorder %s88, %s89
      %p103 = scmp.eq.s32.totalorder %s18, 1
      %p104 = por %p102, %p103
      %p106 = scmp.ne.s32.totalorder %s89, %s105
      %p107 = scmp.eq.s32.totalorder %s18, 0
      %p108 = por %p106, %p107
      %s109 = ssub.s32 %s19, %s31
      %s110 = ssub.s32 %s20, %s27
      %s111 = sor.u32 %s109, %s110
      %p112 = scmp.eq.s32.totalorder %s111, 0
      %s114 = sadd.s32 %s113, 1
      %s115 = scalar_select %p112, %s113, %s114
      %p118 = pneg %p112
      %p119 = scmp.eq.s32.totalorder %s12, 1
      %p120 = por %p118, %p119
      %p121 = scmp.ne.s32.totalorder %s113, %s116
      %p122 = scmp.eq.s32.totalorder %s12, 0
      %p123 = por %p121, %p122
      %p124 = scmp.ne.s32.totalorder %s113, %s116
      %p125 = scmp.eq.s32.totalorder %s17, 1
      %p126 = por %p124, %p125
      %p127 = scmp.ne.s32.totalorder %s116, %s117
      %p128 = scmp.eq.s32.totalorder %s17, 0
      %p129 = por %p127, %p128
      %p130 = scmp.ne.s32.totalorder %s116, %s117
      %p131 = scmp.eq.s32.totalorder %s18, 1
      %p132 = por %p130, %p131
      %p134 = scmp.ne.s32.totalorder %s117, %s133
      %p135 = scmp.eq.s32.totalorder %s18, 0
      %p136 = por %p134, %p135
      %p137 = scmp.le.s32.totalorder 1, %s12
      %p138 = scmp.lt.s32.totalorder %s12, 3
      %p139 = pnand %p137, %p138
      %p140 = pneg %p139
      // Predicated region
      $region9: #{_device_forward.1} parent=5 // pred_check
        _
      $region10: #{_device_forward.1} parent=5 // pred_check_branch
        %142 = sbr.rel (%p139) target = $region12
      $region11: #{_device_forward.1} parent=5 // pred_region
        %s143 = ssub.s32 %s12, 1
        // Predicated region
        $region13: #{_device_forward.1} parent=11 // pred_check
          %p144 = pneg %p73
        $region14: #{_device_forward.1} parent=11 // pred_check_branch
          %146 = sbr.rel (%p144) target = $region16
        $region15: #{_device_forward.1} parent=11 // pred_region
          _
        $region16: #{_device_forward.1} parent=11 // pred_fallthru
          _
      $region12: #{_device_forward.1} parent=5 // pred_fallthru
        _
      %p147 = scmp.lt.s32.totalorder %s12, 2
      // Predicated region
      $region17: #{_device_forward.1} parent=5 // pred_check
        %p148 = pneg %p147
      $region18: #{_device_forward.1} parent=5 // pred_check_branch
        %150 = sbr.rel (%p148) target = $region20
      $region19: #{_device_forward.1} parent=5 // pred_region
        // Predicated region
        $region21: #{_device_forward.1} parent=19 // pred_check
          %p151 = pneg %p46
        $region22: #{_device_forward.1} parent=19 // pred_check_branch
          %153 = sbr.rel (%p151) target = $region24
        $region23: #{_device_forward.1} parent=19 // pred_region
          %s154 = smul.u32 2, %s20
          %p155 = scmp.lt.s32.totalorder %s19, 1
          %s156 = scalar_select %p155, %s19, 1
          %p157 = scmp.lt.s32.totalorder %s154, 1
          %s158 = scalar_select %p157, %s154, 1
          %s159 = smul.addr %s158, 2
          %s160 = smul.addr %s156, 4
          %s161 = sadd.s32 %s159, %s160
          %s162 = smul.addr %s161, 4
          %s163 = scalar_lea.vmem %s0, %s162
          %s164 = smul.u32 2, %s20
        $region24: #{_device_forward.1} parent=19 // pred_fallthru
          _
        // Predicated region
        $region25: #{_device_forward.1} parent=19 // pred_check
          %p165 = pneg %p95
        $region26: #{_device_forward.1} parent=19 // pred_check_branch
          %167 = sbr.rel (%p165) target = $region28
        $region27: #{_device_forward.1} parent=19 // pred_region
          %s168 = smul.u32 2, %s20
          %p169 = scmp.lt.s32.totalorder %s19, 1
          %s170 = scalar_select %p169, %s19, 1
          %p171 = scmp.lt.s32.totalorder %s168, 1
          %s172 = scalar_select %p171, %s168, 1
          %s173 = smul.addr %s170, 2
          %s174 = sadd.s32 %s172, %s173
          %s175 = smul.addr %s174, 4
          %s176 = scalar_lea.vmem %s2, %s175
          %s177 = smul.u32 2, %s20
        $region28: #{_device_forward.1} parent=19 // pred_fallthru
          _
      $region20: #{_device_forward.1} parent=5 // pred_fallthru
        _
      %p178 = scmp.le.s32.totalorder 1, %s12
      %p179 = scmp.lt.s32.totalorder %s12, 3
      %p180 = pnand %p178, %p179
      %p181 = pneg %p180
      // Predicated region
      $region29: #{_device_forward.1} parent=5 // pred_check
        _
      $region30: #{_device_forward.1} parent=5 // pred_check_branch
        %183 = sbr.rel (%p180) target = $region32
      $region31: #{_device_forward.1} parent=5 // pred_region
        %s184 = ssub.s32 %s12, 1
        %s185 = smul.u32 2, %s22
        %p186 = scmp.lt.s32.totalorder %s21, 1
        %s187 = scalar_select %p186, %s21, 1
        %p188 = scmp.lt.s32.totalorder %s185, 1
        %s189 = scalar_select %p188, %s185, 1
        %s190 = smul.addr %s189, 2
        %s191 = smul.addr %s187, 4
        %s192 = sadd.s32 %s190, %s191
        %s193 = smul.addr %s192, 4
        %s194 = scalar_lea.vmem %s0, %s193
        %p195 = pneg %p52
        %p196 = pneg %p49
        %p197 = pneg %p73
        %p198 = pneg %p70
        %s199 = smul.u32 2, %s22
        %p200 = scmp.lt.s32.totalorder %s21, 1
        %s201 = scalar_select %p200, %s21, 1
        %p202 = scmp.lt.s32.totalorder %s199, 1
        %s203 = scalar_select %p202, %s199, 1
        %s204 = smul.addr %s201, 2
        %s205 = sadd.s32 %s203, %s204
        %s206 = smul.addr %s205, 4
        %s207 = scalar_lea.vmem %s2, %s206
        %p208 = pneg %p101
        %p209 = pneg %p98
        %p210 = pneg %p129
        %p211 = pneg %p126
        %s212 = sand.u32 %s116, 1
        %s213 = scalar_lea.sflag [#allocation3], %s212
        %s214 = sand.u32 %s116, 1
        %s215 = smul.addr %s214, 8
        %s216 = scalar_lea.vmem [#allocation2], %s215
        %s217 = smul.u32 2, %s22
        %p218 = scmp.lt.s32.totalorder %s21, 1
        %s219 = scalar_select %p218, %s21, 1
        %p220 = scmp.lt.s32.totalorder %s217, 1
        %s221 = scalar_select %p220, %s217, 1
        %s222 = smul.addr %s221, 2
        %s223 = smul.addr %s219, 4
        %s224 = sadd.s32 %s222, %s223
        %s225 = smul.addr %s224, 4
        %s226 = scalar_lea.vmem %s0, %s225
        %s227 = smul.u32 2, %s22
        %s228 = smul.u32 2, %s22
        %p229 = scmp.lt.s32.totalorder %s21, 1
        %s230 = scalar_select %p229, %s21, 1
        %p231 = scmp.lt.s32.totalorder %s228, 1
        %s232 = scalar_select %p231, %s228, 1
        %s233 = smul.addr %s230, 2
        %s234 = sadd.s32 %s232, %s233
        %s235 = smul.addr %s234, 4
        %s236 = scalar_lea.vmem %s2, %s235
        %s237 = smul.u32 2, %s22
        %s238 = smul.u32 2, %s22
        %v240 = vld [vmem:[%s226] sm:$0xff]
        %v241 = vld [vmem:[%s226 + $0x8] sm:$0xff]
        %v242 = vld [vmem:[%s1] sm:$0xf]
        %v243 = vld [vmem:[%s1 + $0x4] sm:$0xf]
        %v244 = vld [vmem:[%s1 + $0x8] sm:$0xf]
        %v245 = vld [vmem:[%s1 + $0xc] sm:$0xf]
        %v246 = vld [vmem:[%s1 + $0x10] sm:$0xf]
        %v247 = vld [vmem:[%s1 + $0x14] sm:$0xf]
        %v248 = vld [vmem:[%s1 + $0x18] sm:$0xf]
        %v249 = vld [vmem:[%s1 + $0x1c] sm:$0xf]
        %v250 = vld [vmem:[%s1 + $0x20] sm:$0xf]
        %v251 = vld [vmem:[%s1 + $0x24] sm:$0xf]
        %v252 = vld [vmem:[%s1 + $0x28] sm:$0xf]
        %v253 = vld [vmem:[%s1 + $0x2c] sm:$0xf]
        %v254 = vld [vmem:[%s1 + $0x30] sm:$0xf]
        %v255 = vld [vmem:[%s1 + $0x34] sm:$0xf]
        %v256 = vld [vmem:[%s1 + $0x38] sm:$0xf]
        %v257 = vld [vmem:[%s1 + $0x3c] sm:$0xf]
        %v258 = vld [vmem:[%s1 + $0x40] sm:$0xf]
        %v259 = vld [vmem:[%s1 + $0x44] sm:$0xf]
        %v260 = vld [vmem:[%s1 + $0x48] sm:$0xf]
        %v261 = vld [vmem:[%s1 + $0x4c] sm:$0xf]
        %v262 = vld [vmem:[%s1 + $0x50] sm:$0xf]
        %v263 = vld [vmem:[%s1 + $0x54] sm:$0xf]
        %v264 = vld [vmem:[%s1 + $0x58] sm:$0xf]
        %v265 = vld [vmem:[%s1 + $0x5c] sm:$0xf]
        %v266 = vld [vmem:[%s1 + $0x60] sm:$0xf]
        %v267 = vld [vmem:[%s1 + $0x64] sm:$0xf]
        %v268 = vld [vmem:[%s1 + $0x68] sm:$0xf]
        %v269 = vld [vmem:[%s1 + $0x6c] sm:$0xf]
        %v270 = vld [vmem:[%s1 + $0x70] sm:$0xf]
        %v271 = vld [vmem:[%s1 + $0x74] sm:$0xf]
        %v272 = vld [vmem:[%s1 + $0x78] sm:$0xf]
        %v273 = vld [vmem:[%s1 + $0x7c] sm:$0xf]
        %v274 = vld [vmem:[%s236] sm:$0xf]
        %v275 = vld [vmem:[%s236 + $0x4] sm:$0xf]
        %v276 = vunpack.c.l.bf16 %v274
        %v277 = vunpack.c.l.bf16 %v275
        %v280 = vunpack.c.l.b16 %v240
        %v281 = vunpack.c.h.b16 %v240
        %v282 = vunpack.c.l.b16 %v241
        %v283 = vunpack.c.h.b16 %v241
        %v284 = vpack.c.b16 %v282, %v280
        %v285 = vpack.c.b16 %v283, %v281
        %v320 = vunpack.c.l.b16 %v242
        %v321 = vunpack.c.l.b16 %v243
        %v322 = vunpack.c.l.b16 %v244
        %v323 = vunpack.c.l.b16 %v245
        %v324 = vunpack.c.l.b16 %v246
        %v325 = vunpack.c.l.b16 %v247
        %v326 = vunpack.c.l.b16 %v248
        %v327 = vunpack.c.l.b16 %v249
        %v328 = vunpack.c.l.b16 %v250
        %v329 = vunpack.c.l.b16 %v251
        %v330 = vunpack.c.l.b16 %v252
        %v331 = vunpack.c.l.b16 %v253
        %v332 = vunpack.c.l.b16 %v254
        %v333 = vunpack.c.l.b16 %v255
        %v334 = vunpack.c.l.b16 %v256
        %v335 = vunpack.c.l.b16 %v257
        %v336 = vunpack.c.l.b16 %v258
        %v337 = vunpack.c.l.b16 %v259
        %v338 = vunpack.c.l.b16 %v260
        %v339 = vunpack.c.l.b16 %v261
        %v340 = vunpack.c.l.b16 %v262
        %v341 = vunpack.c.l.b16 %v263
        %v342 = vunpack.c.l.b16 %v264
        %v343 = vunpack.c.l.b16 %v265
        %v344 = vunpack.c.l.b16 %v266
        %v345 = vunpack.c.l.b16 %v267
        %v346 = vunpack.c.l.b16 %v268
        %v347 = vunpack.c.l.b16 %v269
        %v348 = vunpack.c.l.b16 %v270
        %v349 = vunpack.c.l.b16 %v271
        %v350 = vunpack.c.l.b16 %v272
        %v351 = vunpack.c.l.b16 %v273
        %v352 = vpack.c.b16 %v321, %v320
        %v353 = vpack.c.b16 %v323, %v322
        %v354 = vpack.c.b16 %v325, %v324
        %v355 = vpack.c.b16 %v327, %v326
        %v356 = vpack.c.b16 %v329, %v328
        %v357 = vpack.c.b16 %v331, %v330
        %v358 = vpack.c.b16 %v333, %v332
        %v359 = vpack.c.b16 %v335, %v334
        %v360 = vpack.c.b16 %v337, %v336
        %v361 = vpack.c.b16 %v339, %v338
        %v362 = vpack.c.b16 %v341, %v340
        %v363 = vpack.c.b16 %v343, %v342
        %v364 = vpack.c.b16 %v345, %v344
        %v365 = vpack.c.b16 %v347, %v346
        %v366 = vpack.c.b16 %v349, %v348
        %v367 = vpack.c.b16 %v351, %v350
        %384 = vmatprep.subr.bf16.mxu0 0
        %385 = vmatpush1.bf16.msra.mxu0 %v359
        %386 = vmatprep.subr.bf16.mxu0 0
        %387 = vmatpush1.bf16.msra.mxu0 %v358
        %388 = vmatprep.subr.bf16.mxu0 0
        %389 = vmatpush1.bf16.msra.mxu0 %v357
        %390 = vmatprep.subr.bf16.mxu0 0
        %391 = vmatpush1.bf16.msra.mxu0 %v356
        %392 = vmatprep.subr.bf16.mxu0 0
        %393 = vmatpush1.bf16.msra.mxu0 %v355
        %394 = vmatprep.subr.bf16.mxu0 0
        %395 = vmatpush1.bf16.msra.mxu0 %v354
        %396 = vmatprep.subr.bf16.mxu0 0
        %397 = vmatpush1.bf16.msra.mxu0 %v353
        %398 = vmatprep.subr.bf16.mxu0 0
        %399 = vmatpush1.bf16.msra.mxu0 %v352
        %400 = vmatprep.subr.bf16.mxu0 0
        %401 = vmatpush2.bf16.msra.mxu0 %v367
        %402 = vmatprep.subr.bf16.mxu0 0
        %403 = vmatpush2.bf16.msra.mxu0 %v366
        %404 = vmatprep.subr.bf16.mxu0 0
        %405 = vmatpush2.bf16.msra.mxu0 %v365
        %406 = vmatprep.subr.bf16.mxu0 0
        %407 = vmatpush2.bf16.msra.mxu0 %v364
        %408 = vmatprep.subr.bf16.mxu0 0
        %409 = vmatpush2.bf16.msra.mxu0 %v363
        %410 = vmatprep.subr.bf16.mxu0 0
        %411 = vmatpush2.bf16.msra.mxu0 %v362
        %412 = vmatprep.subr.bf16.mxu0 0
        %413 = vmatpush2.bf16.msra.mxu0 %v361
        %414 = vmatprep.subr.bf16.mxu0 0
        %415 = vmatpush2.bf16.msra.mxu0 %v360
        %416 = vmatprep.mubr.bf16.mxu0 %v285
        %417 = vmatmul.mubr.bf16.gmra.mxu0 %v284
        %v418 = vpop.f32.mrf.mxu0
        %v419 = vadd.f32 %v276, %v418
        %v420 = vpop.f32.mrf.mxu0
        %v421 = vpop.f32.mrf.mxu0
        %v422 = vadd.f32 %v277, %v421
        %v423 = vpop.f32.mrf.mxu0
        %424 = vdwg.mxu0
        %v425 = vpack.c.bf16 %v422, %v419
        %v427 = vunpack.c.l.b16 %v425
        %v428 = vunpack.c.h.b16 %v425
        %v429 = vpack.c.b16 %v427, %v427
        %v430 = vpack.c.b16 %v428, %v428
        %433 = vst [vmem:[%s216] sm:$0xf] %v429
        %434 = vst [vmem:[%s216 + $0x4] sm:$0xf] %v430
        %s435 = sand.u32 %s116, 1
        %s436 = scalar_lea.sflag [#allocation3], %s435
        %s437 = sand.u32 %s116, 1
        %s438 = smul.addr %s437, 8
        %s439 = scalar_lea.vmem [#allocation2], %s438
        // Predicated region
        $region33: #{_device_forward.1} parent=31 // pred_check
          %p440 = pneg %p126
        $region34: #{_device_forward.1} parent=31 // pred_check_branch
          %442 = sbr.rel (%p440) target = $region36
        $region35: #{_device_forward.1} parent=31 // pred_region
          %s443 = smul.u32 2, %s22
          %s445 = ssub.s32 128, 128
          %446 = vsyncadd %s436, %s445
          %s447 = smul.addr %s21, 2
          %s448 = sadd.s32 %s443, %s447
          %s449 = smul.addr %s448, 64
          %s450 = scalar_lea.hbm %s3, %s449
          %s451 = sshll.u32 %s439, 4
          %s452 = int_to_ptr.vmem [resolvable:$true] %s451
          %457 = dma.vmem_to_hbm [thread:$0]  %s452, 128, %s450, %s436, 64, 64, 4
        $region36: #{_device_forward.1} parent=31 // pred_fallthru
          _
      $region32: #{_device_forward.1} parent=5 // pred_fallthru
        _
      %p458 = scmp.le.s32.totalorder 2, %s12
      // Predicated region
      $region37: #{_device_forward.1} parent=5 // pred_check
        %p459 = pneg %p458
      $region38: #{_device_forward.1} parent=5 // pred_check_branch
        %461 = sbr.rel (%p459) target = $region40
      $region39: #{_device_forward.1} parent=5 // pred_region
        %s462 = ssub.s32 %s12, 2
        // Predicated region
        $region41: #{_device_forward.1} parent=39 // pred_check
          %p463 = pneg %p132
        $region42: #{_device_forward.1} parent=39 // pred_check_branch
          %465 = sbr.rel (%p463) target = $region44
        $region43: #{_device_forward.1} parent=39 // pred_region
          %s466 = sand.u32 %s117, 1
          %s467 = scalar_lea.sflag [#allocation3], %s466
          %s468 = sand.u32 %s117, 1
          %s469 = smul.addr %s468, 8
          %s470 = scalar_lea.vmem [#allocation2], %s469
          %471 = dma.done %s467, 128
        $region44: #{_device_forward.1} parent=39 // pred_fallthru
          _
      $region40: #{_device_forward.1} parent=5 // pred_fallthru
        _
    $region6: #{_device_forward.1} parent=1 // loop_footer
      %s16 = sadd.s32 1, %s12
    $region7: #{_device_forward.1} parent=1 // loop_footer_branch
      %11 = sbr.rel target = $region3
    $region8: #{_device_forward.1} parent=1 // loop_exit
      _
    %472 = vsyncpa [#allocation3], 1
    %s473 = scalar_lea.sflag [#allocation3], 1
    %474 = vsyncpa %s473, 1

</llo_original>
